<compile_context>
chip_gen: v7x
topology: tpu7x:2x2x1
jax: 0.10.0
libtpu: 0.0.40
codegen_flags: <defaults>
</compile_context>

<pallas_src>
import math
import functools

import jax
import jax.numpy as jnp
from jax.experimental import pallas as pl
from jax.experimental.pallas import tpu as pltpu


_LANES = 128
_TILE_BYTES = 4 << 20          # ~4 MiB per (single) buffer
_VMEM_LIMIT = 32 * 1024 * 1024  # safe on v5e/v6e/v7x


# --------------------------------------------------------------------------
# Pallas kernels (pure jnp ops -> lower on Mosaic TPU and in interpret mode)
# --------------------------------------------------------------------------
def _affine_kernel(x_ref, o_ref, *, scale, shift):
    """out = x * scale (+ shift).  Handles both:
       - x ~ N(0,1) float32          -> normal-family inits (scale=std, shift=mean)
       - x = 24-bit uniform int32    -> uniform-family inits
         (scale=(high-low)/2**24, shift=low folds the bits->[0,1) conversion
          and the affine rescale into one multiply-add)."""
    x = x_ref[...].astype(jnp.float32)
    y = x * jnp.float32(scale)
    if shift != 0.0:                      # static constant: dead add skipped
        y = y + jnp.float32(shift)
    o_ref[...] = y.astype(o_ref.dtype)


def _affine_clip_kernel(x_ref, o_ref, *, scale, shift, lo, hi):
    # TODO(synk): torch.nn.init.trunc_normal_ uses inverse-CDF sampling;
    # clamping a normal draw only approximates the truncated distribution.
    x = x_ref[...].astype(jnp.float32)
    y = x * jnp.float32(scale)
    if shift != 0.0:
        y = y + jnp.float32(shift)
    o_ref[...] = jnp.clip(y, lo, hi).astype(o_ref.dtype)


# --------------------------------------------------------------------------
# pallas_call wrapper: lane-dense flat slab, budget-sized row tiles
# --------------------------------------------------------------------------
def _round_up(x, k):
    return ((x + k - 1) // k) * k


def _normal_source(key, shp):
    return jax.random.normal(key, shp, dtype=jnp.float32)


def _bits_source(key, shp):
    # 24-bit uniform integers; converted to [0, 1) inside the kernel.
    return jax.random.randint(key, shp, 0, 1 << 24, dtype=jnp.int32)


def _pallas_fill(kernel_fn, source_fn, shape, seed, dtype=jnp.float32):
    m, n = int(shape[0]), int(shape[1])
    total = m * n

    # Lane-dense layout: (rows, 128), rows padded to a multiple of the tile.
    rows = pl.cdiv(total, _LANES)
    target_rows = max(8, _TILE_BYTES // (_LANES * 4))      # ~8192 rows for 4-byte elems
    block_rows = min(target_rows, _round_up(rows, 8))
    rows_pad = _round_up(rows, block_rows)
    grid = (rows_pad // block_rows,)

    key = jax.random.PRNGKey(int(seed))
    rand2d = source_fn(key, (rows_pad, _LANES))

    out2d = pl.pallas_call(
        kernel_fn,
        out_shape=jax.ShapeDtypeStruct((rows_pad, _LANES), dtype),
        grid=grid,
        in_specs=[pl.BlockSpec((block_rows, _LANES), lambda i: (i, 0))],
        out_specs=pl.BlockSpec((block_rows, _LANES), lambda i: (i, 0)),
        compiler_params=pltpu.CompilerParams(
            dimension_semantics=("parallel",),
            vmem_limit_bytes=_VMEM_LIMIT),
    )(rand2d)

    return out2d.reshape(-1)[:total].reshape(m, n)


# --------------------------------------------------------------------------
# JAX port of the Initialization factory module
# --------------------------------------------------------------------------
class InitializationEnum:
    kaiming_normal = "kaiming_normal"
    kaiming_uniform = "kaiming_uniform"
    orthogonal = "orthogonal"
    sparse = "sparse"
    trunc_normal = "trunc_normal"
    xavier_normal = "xavier_normal"
    xavier_uniform = "xavier_uniform"
    default = "default"


def _fans(shape):
    # torch convention for 2-D weights: (out_features, in_features)
    fan_out, fan_in = shape[0], shape[1]
    return fan_in, fan_out


class Initialization:
    """Functional port: forward() returns `func(shape, seed) -> jnp.ndarray`."""

    def __init__(self, *args, **kwargs) -> None:
        self.cfg = kwargs["cfg"]

    # --- individual initializers -------------------------------------------
    def kaiming_normal_initializer(self, shape, seed=0, dtype=jnp.float32):
        fan_in, fan_out = _fans(shape)
        fan = fan_in if self.cfg.get("fan", "fan_in") == "fan_in" else fan_out
        gain = 1.0  # torch calculate_gain('sigmoid') == 1 (matches the module)
        std = gain / math.sqrt(fan)
        return _pallas_fill(
            functools.partial(_affine_kernel, scale=std, shift=0.0),
            _normal_source, shape, seed, dtype)

    def kaiming_uniform_initializer(self, shape, seed=0, dtype=jnp.float32):
        fan_in, _ = _fans(shape)
        gain = math.sqrt(2.0)  # torch default: leaky_relu, a=0 (as in nn.init.kaiming_uniform_)
        bound = gain * math.sqrt(3.0 / fan_in)
        return _pallas_fill(
            functools.partial(_affine_kernel,
                              scale=(2.0 * bound) / float(1 << 24), shift=-bound),
            _bits_source, shape, seed, dtype)

    def xavier_normal_initializer(self, shape, seed=0, dtype=jnp.float32):
        fan_in, fan_out = _fans(shape)
        std = self.cfg.get("gain", 1.0) * math.sqrt(2.0 / (fan_in + fan_out))
        return _pallas_fill(
            functools.partial(_affine_kernel, scale=std, shift=0.0),
            _normal_source, shape, seed, dtype)

    def xavier_uniform_initializer(self, shape, seed=0, dtype=jnp.float32):
        fan_in, fan_out = _fans(shape)
        bound = math.sqrt(6.0 / (fan_in + fan_out))  # gain = 1 (torch default)
        return _pallas_fill(
            functools.partial(_affine_kernel,
                              scale=(2.0 * bound) / float(1 << 24), shift=-bound),
            _bits_source, shape, seed, dtype)

    def trunc_normal_initializer(self, shape, seed=0, dtype=jnp.float32):
        # torch defaults: mean=0, std=1, a=-2, b=2
        return _pallas_fill(
            functools.partial(_affine_clip_kernel,
                              scale=1.0, shift=0.0, lo=-2.0, hi=2.0),
            _normal_source, shape, seed, dtype)

    def orthogonal_initializer(self, shape, seed=0, dtype=jnp.float32):
        # Random normal fill happens in the Pallas kernel; QR is plain-JAX glue.
        # TODO(synk): QR decomposition has no clean Pallas equivalent.
        m, n = shape
        flat = _pallas_fill(
            functools.partial(_affine_kernel, scale=1.0, shift=0.0),
            _normal_source, shape, seed, jnp.float32)
        a = flat if m >= n else flat.T
        q, r = jnp.linalg.qr(a)
        q = q * jnp.sign(jnp.diagonal(r))
        out = q if m >= n else q.T
        return out.astype(dtype)

    def sparse_initializer(self, shape, seed=0, dtype=jnp.float32):
        # Normal(0, 0.01) fill in the kernel; exact per-column 50% sparsity mask in JAX glue.
        m, n = shape
        w = _pallas_fill(
            functools.partial(_affine_kernel, scale=0.01, shift=0.0),
            _normal_source, shape, seed, dtype)
        num_zeros = int(math.ceil(0.5 * m))
        key = jax.random.fold_in(jax.random.PRNGKey(0), seed)
        scores = jax.random.uniform(key, (m, n))
        ranks = jnp.argsort(jnp.argsort(scores, axis=0), axis=0)
        return jnp.where(ranks >= num_zeros, w, jnp.zeros((), dtype=w.dtype))

    def uniform_initializer(self, shape, seed=0, dtype=jnp.float32):
        stdv = 1.0 / math.sqrt(6)
        return _pallas_fill(
            functools.partial(_affine_kernel,
                              scale=(2.0 * stdv) / float(1 << 24), shift=-stdv),
            _bits_source, shape, seed, dtype)

    # --- factory forward() ---------------------------------------------------
    def forward(self, *args, **kwargs):
        init = self.cfg["initialization"]
        if init == InitializationEnum.kaiming_normal:
            return self.kaiming_normal_initializer
        elif init == InitializationEnum.kaiming_uniform:
            return self.kaiming_uniform_initializer
        elif init == InitializationEnum.orthogonal:
            return self.orthogonal_initializer
        elif init == InitializationEnum.sparse:
            return self.sparse_initializer
        elif init == InitializationEnum.trunc_normal:
            return self.trunc_normal_initializer
        elif init == InitializationEnum.xavier_normal:
            return self.xavier_normal_initializer
        elif init == InitializationEnum.xavier_uniform:
            return self.xavier_uniform_initializer
        else:
            return self.uniform_initializer

    __call__ = forward


# --------------------------------------------------------------------------
if __name__ == "__main__":
    # Deterministic seed derived from PRNGKey(0)
    key = jax.random.PRNGKey(0)
    seed = int(jax.random.randint(key, (), 0, 2**31 - 1))

    weight_shape = (32, 64)   # (out_features=32, in_features=64)

    schemes = [
        InitializationEnum.kaiming_normal,
        InitializationEnum.xavier_uniform,
        InitializationEnum.trunc_normal,
        "some_unknown_scheme",          # -> default uniform path
    ]

    results = {}
    for scheme in schemes:
        cfg = {"initialization": scheme, "fan": "fan_in", "gain": 1.0}
        init_factory = Initialization(cfg=cfg)
        init_fn = init_factory.forward()            # returns the initializer callable
        w = init_fn(weight_shape, seed=seed)
        results[scheme] = w

    for scheme, w in results.items():
        jax.block_until_ready(w)
        assert w.shape == weight_shape and w.dtype == jnp.float32
        assert bool(jnp.all(jnp.isfinite(w)))

    # scheme-specific sanity checks
    xb = math.sqrt(6.0 / (64 + 32))
    assert bool(jnp.all(jnp.abs(results[InitializationEnum.xavier_uniform]) <= xb + 1e-6))
    assert bool(jnp.all(jnp.abs(results[InitializationEnum.trunc_normal]) <= 2.0 + 1e-6))
    assert bool(jnp.all(jnp.abs(results["some_unknown_scheme"]) <= 1.0 / math.sqrt(6) + 1e-6))

    print("KERNEL_OK")
</pallas_src>

<mosaic_0001>
module attributes {stable_mosaic.version = 11 : i64} {
  func.func @_affine_kernel(%arg0: i32, %arg1: memref<16x128xf32, #tpu.memory_space<vmem>>, %arg2: memref<16x128xf32, #tpu.memory_space<vmem>>) attributes {dimension_semantics = [#tpu.dimension_semantics<parallel>], iteration_bounds = array<i64: 1>, scalar_prefetch = 0 : i64, scratch_operands = 0 : i64, tpu.core_type = #tpu.core_type<tc>, window_params = [{transform_indices = @transform_0, window_bounds = array<i64: 16, 128>}, {transform_indices = @transform_1, window_bounds = array<i64: 16, 128>}]} {
    %c0 = arith.constant 0 : index
    %c0_0 = arith.constant 0 : index
    %0 = vector.load %arg1[%c0, %c0_0] : memref<16x128xf32, #tpu.memory_space<vmem>>, vector<16x128xf32>
    %cst = arith.constant 1.250000e-01 : f32
    %1 = vector.broadcast %cst : f32 to vector<16x128xf32>
    %2 = arith.mulf %0, %1 : vector<16x128xf32>
    %c0_1 = arith.constant 0 : index
    %c0_2 = arith.constant 0 : index
    %3 = vector.load %arg2[%c0_1, %c0_2] : memref<16x128xf32, #tpu.memory_space<vmem>>, vector<16x128xf32>
    tpu.vector_store %arg2[%c0_1, %c0_2], %2 {strides = array<i32>} : memref<16x128xf32, #tpu.memory_space<vmem>>, vector<16x128xf32>,
    return
  }
  func.func @transform_0(%arg0: i32) -> (i32, i32) {
    %c0_i32 = arith.constant 0 : i32
    %c0_i32_0 = arith.constant 0 : i32
    return %arg0, %c0_i32 : i32, i32
  }
  func.func @transform_1(%arg0: i32) -> (i32, i32) {
    %c0_i32 = arith.constant 0 : i32
    %c0_i32_0 = arith.constant 0 : i32
    return %arg0, %c0_i32 : i32, i32
  }
}

</mosaic_0001>

<llo_original>
// kernel: tpu_custom_call.1
$region0: #{tpu_custom_call.1}
  #allocation0 [shape = 'u32[]', space=smem, size = 0x4, offset = 0x4, fixed_abs, tag = 'smem constant byte address 0x4 - core index']
  #allocation1 [shape = 'u32[144,128]{1,0:T(1,128)}', space=vmem, size = 0x12000, scoped, tag = 'internal scratch']
  %s0 = inlined_call_operand.hbm [shape: f32[16,128], index: 0, kind: input, shape index: {}]
  %s1 = inlined_call_operand.hbm [shape: f32[16,128], index: 1, kind: output, shape index: {}]
  %s2 = sld [smem:[#allocation0]]
  $region18: #{tpu_custom_call.1} parent=0
    _
  %s4 = ssub.s32 1, %s2
  %s5 = scalar_select 0, %s4, %s2
  $region1: #{tpu_custom_call.1} parent=0
    #allocation2 [shape = 'u8[8192]{0}', space=vmem, size = 0x2000, scoped, tag = 'input window, operand 0, single buffered']
    #allocation3 [shape = 's32[1]{0}', space=sflag, size = 0x4, scoped, tag = 'scoped memory for tpu_custom_call.1']
    #allocation4 [shape = 's32[1]{0}', space=sflag, size = 0x4, scoped, tag = 'scoped memory for tpu_custom_call.1']
    #allocation5 [shape = 'u8[8192]{0}', space=vmem, size = 0x2000, scoped, tag = 'output window, operand 0, single buffered']
    %6 = vsyncpa [#allocation3], 0
    %7 = vsyncpa [#allocation4], 0
    // Predicated region
    $region2: #{tpu_custom_call.1} parent=1 // pred_check
      _
    $region3: #{tpu_custom_call.1} parent=1 // pred_check_branch
      %9 = sbr.rel (0) target = $region5
    $region4: #{tpu_custom_call.1} parent=1 // pred_region
      %s11 = ssub.s32 256, 256
      %12 = vsyncadd [#allocation3], %s11
      %s13 = sshll.u32 [#allocation2], 4
      %s14 = int_to_ptr.vmem [resolvable:$true] %s13
      %19 = dma.hbm_to_vmem [thread:$0]  %s0, 256, %s14, [#allocation3], 128, 128, 8
    $region5: #{tpu_custom_call.1} parent=1 // pred_fallthru
      _
    // Predicated region
    $region6: #{tpu_custom_call.1} parent=1 // pred_check
      _
    $region7: #{tpu_custom_call.1} parent=1 // pred_check_branch
      %21 = sbr.rel (0) target = $region9
    $region8: #{tpu_custom_call.1} parent=1 // pred_region
      %22 = dma.done [#allocation3], 256
    $region9: #{tpu_custom_call.1} parent=1 // pred_fallthru
      _
    %v23 = vld [vmem:[#allocation2] sm:$0xff]
    %v24 = vld [vmem:[#allocation2 + $0x8] sm:$0xff]
    %v25 = vmul.f32 %v23, 0.125
    %v26 = vmul.f32 %v24, 0.125
    %27 = vst [vmem:[#allocation5] sm:$0xff] %v25
    %28 = vst [vmem:[#allocation5 + $0x8] sm:$0xff] %v26
    // Predicated region
    $region10: #{tpu_custom_call.1} parent=1 // pred_check
      _
    $region11: #{tpu_custom_call.1} parent=1 // pred_check_branch
      %30 = sbr.rel (0) target = $region13
    $region12: #{tpu_custom_call.1} parent=1 // pred_region
      %s32 = ssub.s32 256, 256
      %33 = vsyncadd [#allocation4], %s32
      %s34 = sshll.u32 [#allocation5], 4
      %s35 = int_to_ptr.vmem [resolvable:$true] %s34
      %40 = dma.vmem_to_hbm [thread:$0]  %s35, 256, %s1, [#allocation4], 128, 128, 8
    $region13: #{tpu_custom_call.1} parent=1 // pred_fallthru
      _
    // Predicated region
    $region14: #{tpu_custom_call.1} parent=1 // pred_check
      _
    $region15: #{tpu_custom_call.1} parent=1 // pred_check_branch
      %42 = sbr.rel (0) target = $region17
    $region16: #{tpu_custom_call.1} parent=1 // pred_region
      %43 = dma.done [#allocation4], 256
    $region17: #{tpu_custom_call.1} parent=1 // pred_fallthru
      _
    %44 = vsyncpa [#allocation3], 1
    %45 = vsyncpa [#allocation4], 1

</llo_original>
